<compile_context>
chip_gen: v7x
topology: tpu7x:2x2x1
jax: 0.10.0
libtpu: 0.0.40
codegen_flags: <defaults>
</compile_context>

<pallas_src>
import functools

import jax
import jax.numpy as jnp
from jax import lax
from jax.experimental import pallas as pl
from jax.experimental.pallas import tpu as pltpu


def patch_embed_kernel(p_ref, w_ref, b_ref, g_ref, beta_ref, o_ref):
    # p_ref:   (tm, K)  bf16   im2col'd patch rows
    # w_ref:   (K, E)   bf16   conv weight, reshaped + transposed to (in, out)
    # b_ref:   (1, E)   f32    conv bias
    # g_ref:   (1, E)   f32    LayerNorm gamma
    # beta_ref:(1, E)   f32    LayerNorm beta
    # o_ref:   (tm, E)  f32
    y = jnp.dot(p_ref[...], w_ref[...], preferred_element_type=jnp.float32)
    y = y + b_ref[0]

    # LayerNorm over the embed dim, stats in f32 (PyTorch eps=1e-5).
    mu = jnp.mean(y, axis=-1, keepdims=True)
    var = jnp.mean((y - mu) ** 2, axis=-1, keepdims=True)
    y = (y - mu) * lax.rsqrt(var + 1e-5) * g_ref[0] + beta_ref[0]

    o_ref[...] = y.astype(o_ref.dtype)


def _round_up(x, m):
    return (x + m - 1) // m * m


def _pick_row_tile(m):
    # Prefer >=2 grid steps (megacore on v7x) with sublane-multiple tiles;
    # fall back to a single full-size step for tiny inputs.
    for tm in (512, 256, 128, 64, 32, 16, 8):
        if m % tm == 0 and m // tm >= 2:
            return tm
    return m


def patch_embed(x, params, *, patch_size):
    """Returns (tokens, H_out, W_out) just like the PyTorch module."""
    B, C, H, W = x.shape
    ph, pw = patch_size
    Hp, Wp = H // ph, W // pw
    N = Hp * Wp
    E = params["proj_w"].shape[0]
    K = C * ph * pw

    # ---- im2col: layout plumbing only (no FLOPs), done in the wrapper ------
    # (B, C, Hp, ph, Wp, pw) -> (B, Hp, Wp, C, ph, pw) -> (B*N, C*ph*pw)
    # The (C, ph, pw) flattening order matches Conv2d's OIHW weight layout.
    patches = x.reshape(B, C, Hp, ph, Wp, pw).transpose(0, 2, 4, 1, 3, 5)
    patches = patches.reshape(B * N, K)

    M = B * N
    Mp = _round_up(M, 8)
    if Mp != M:
        patches = jnp.pad(patches, ((0, Mp - M), (0, 0)))
    tm = _pick_row_tile(Mp)

    # bf16 operands for the MXU (accumulation stays f32 in the kernel).
    patches = patches.astype(jnp.bfloat16)
    w = params["proj_w"].reshape(E, K).T.astype(jnp.bfloat16)          # (K, E)
    b = params["proj_b"].reshape(1, E).astype(jnp.float32)
    g = params["gamma"].reshape(1, E).astype(jnp.float32)
    beta = params["beta"].reshape(1, E).astype(jnp.float32)

    # Explicit VMEM budget: double-buffered row tiles + weights + params.
    footprint = 2 * (tm * K * 2 + tm * E * 4 + K * E * 2) + 3 * E * 4
    vmem_limit = int(min(100 * 1024 * 1024, max(8 * 1024 * 1024, 4 * footprint)))

    grid = (Mp // tm,)
    flat = pl.pallas_call(
        patch_embed_kernel,
        out_shape=jax.ShapeDtypeStruct((Mp, E), jnp.float32),
        grid_spec=pltpu.PrefetchScalarGridSpec(
            num_scalar_prefetch=0,
            grid=grid,
            in_specs=[
                pl.BlockSpec((tm, K), lambda i: (i, 0)),   # patch rows
                pl.BlockSpec((K, E), lambda i: (0, 0)),    # conv weight (constant)
                pl.BlockSpec((1, E), lambda i: (0, 0)),    # conv bias
                pl.BlockSpec((1, E), lambda i: (0, 0)),    # LN gamma
                pl.BlockSpec((1, E), lambda i: (0, 0)),    # LN beta
            ],
            out_specs=pl.BlockSpec((tm, E), lambda i: (i, 0)),
        ),
        compiler_params=pltpu.CompilerParams(
            dimension_semantics=("parallel",),
            vmem_limit_bytes=vmem_limit,
        ),
    )(patches, w, b, g, beta)

    out = flat[:M].reshape(B, N, E)
    return out, Hp, Wp


def reference_patch_embed(x, params, *, patch_size):
    """Plain-JAX reference reproducing the PyTorch forward in f32."""
    ph, pw = patch_size
    y = lax.conv_general_dilated(
        x, params["proj_w"], window_strides=(ph, pw), padding="VALID",
        dimension_numbers=("NCHW", "OIHW", "NCHW"))
    y = y + params["proj_b"].reshape(1, -1, 1, 1)
    B, E, Hp, Wp = y.shape
    y = y.reshape(B, E, Hp * Wp).transpose(0, 2, 1)                    # (B, N, E)
    mu = jnp.mean(y, axis=-1, keepdims=True)
    var = jnp.mean((y - mu) ** 2, axis=-1, keepdims=True)
    y = (y - mu) / jnp.sqrt(var + 1e-5) * params["gamma"] + params["beta"]
    return y, Hp, Wp


def init_params(key, in_chans, embed_dim, patch_size):
    ph, pw = patch_size
    k1, k2 = jax.random.split(key)
    fan_in = in_chans * ph * pw
    std = (2.0 / (fan_in + embed_dim)) ** 0.5
    return {
        "proj_w": std * jax.random.normal(
            k1, (embed_dim, in_chans, ph, pw), jnp.float32),   # OIHW, like Conv2d
        "proj_b": 0.01 * jax.random.normal(k2, (embed_dim,), jnp.float32),
        "gamma": jnp.ones((embed_dim,), jnp.float32),
        "beta": jnp.zeros((embed_dim,), jnp.float32),
    }


if __name__ == "__main__":
    B, C, H, W = 2, 3, 32, 32
    patch = (8, 8)
    embed_dim = 128                      # lane-dense (multiple of 128) output

    key = jax.random.PRNGKey(0)
    kx, kp = jax.random.split(key)
    x = jax.random.normal(kx, (B, C, H, W), jnp.float32)
    params = init_params(kp, C, embed_dim, patch)

    out, Hp, Wp = patch_embed(x, params, patch_size=patch)
    out = jax.block_until_ready(out)

    ref, Hp_r, Wp_r = reference_patch_embed(x, params, patch_size=patch)
    assert out.shape == (B, Hp * Wp, embed_dim)
    assert (Hp, Wp) == (Hp_r, Wp_r) == (H // patch[0], W // patch[1])
    max_err = float(jnp.max(jnp.abs(out - ref)))
    # bf16 MXU operands vs f32 reference: tolerance widened accordingly.
    assert jnp.allclose(out, ref, atol=5e-2, rtol=5e-2), max_err
    print("KERNEL_OK")
</pallas_src>

<mosaic_0001>
module attributes {stable_mosaic.version = 11 : i64} {
  func.func @patch_embed_kernel(%arg0: i32, %arg1: memref<16x192xbf16, #tpu.memory_space<vmem>>, %arg2: memref<192x128xbf16, #tpu.memory_space<vmem>>, %arg3: memref<1x128xf32, #tpu.memory_space<vmem>>, %arg4: memref<1x128xf32, #tpu.memory_space<vmem>>, %arg5: memref<1x128xf32, #tpu.memory_space<vmem>>, %arg6: memref<16x128xf32, #tpu.memory_space<vmem>>) attributes {dimension_semantics = [#tpu.dimension_semantics<parallel>], iteration_bounds = array<i64: 2>, scalar_prefetch = 0 : i64, scratch_operands = 0 : i64, tpu.core_type = #tpu.core_type<tc>, window_params = [{transform_indices = @transform_0, window_bounds = array<i64: 16, 192>}, {pipeline_mode = #tpu.pipeline_mode<synchronous>, transform_indices = @transform_1, window_bounds = array<i64: 192, 128>}, {pipeline_mode = #tpu.pipeline_mode<synchronous>, transform_indices = @transform_2, window_bounds = array<i64: 1, 128>}, {pipeline_mode = #tpu.pipeline_mode<synchronous>, transform_indices = @transform_3, window_bounds = array<i64: 1, 128>}, {pipeline_mode = #tpu.pipeline_mode<synchronous>, transform_indices = @transform_4, window_bounds = array<i64: 1, 128>}, {transform_indices = @transform_5, window_bounds = array<i64: 16, 128>}]} {
    %c0 = arith.constant 0 : index
    %c0_0 = arith.constant 0 : index
    %0 = vector.load %arg1[%c0, %c0_0] : memref<16x192xbf16, #tpu.memory_space<vmem>>, vector<16x192xbf16>
    %c0_1 = arith.constant 0 : index
    %c0_2 = arith.constant 0 : index
    %1 = vector.load %arg2[%c0_1, %c0_2] : memref<192x128xbf16, #tpu.memory_space<vmem>>, vector<192x128xbf16>
    %cst = arith.constant dense<0.000000e+00> : vector<16x128xf32>
    %2 = tpu.matmul %0, %1, %cst {dimension_numbers = #tpu.dot_dimension_numbers<[1], [0], [0], [1], [0, 0, 1, 1], [], []>} : vector<16x192xbf16>, vector<192x128xbf16>, vector<16x128xf32> -> vector<16x128xf32>
    %c0_3 = arith.constant 0 : index
    %c0_4 = arith.constant 0 : index
    %3 = vector.load %arg3[%c0_3, %c0_4] : memref<1x128xf32, #tpu.memory_space<vmem>>, vector<1x128xf32>
    %4 = vector.shape_cast %3 : vector<1x128xf32> to vector<128xf32>
    %5 = vector.shape_cast %4 : vector<128xf32> to vector<1x128xf32>
    %6 = vector.broadcast %5 : vector<1x128xf32> to vector<16x128xf32>
    %7 = arith.addf %2, %6 : vector<16x128xf32>
    %cst_5 = arith.constant dense<0.000000e+00> : vector<16xf32>
    %8 = vector.multi_reduction <add>, %7, %cst_5 [1] : vector<16x128xf32> to vector<16xf32>
    %9 = vector.shape_cast %8 : vector<16xf32> to vector<16x1xf32>
    %cst_6 = arith.constant 1.280000e+02 : f32
    %10 = vector.broadcast %cst_6 : f32 to vector<16x1xf32>
    %11 = arith.divf %9, %10 : vector<16x1xf32>
    %12 = vector.broadcast %11 : vector<16x1xf32> to vector<16x128xf32>
    %13 = arith.subf %7, %12 : vector<16x128xf32>
    %14 = arith.mulf %13, %13 : vector<16x128xf32>
    %cst_7 = arith.constant dense<0.000000e+00> : vector<16xf32>
    %15 = vector.multi_reduction <add>, %14, %cst_7 [1] : vector<16x128xf32> to vector<16xf32>
    %16 = vector.shape_cast %15 : vector<16xf32> to vector<16x1xf32>
    %cst_8 = arith.constant 1.280000e+02 : f32
    %17 = vector.broadcast %cst_8 : f32 to vector<16x1xf32>
    %18 = arith.divf %16, %17 : vector<16x1xf32>
    %19 = vector.broadcast %11 : vector<16x1xf32> to vector<16x128xf32>
    %20 = arith.subf %7, %19 : vector<16x128xf32>
    %cst_9 = arith.constant 9.99999974E-6 : f32
    %21 = vector.broadcast %cst_9 : f32 to vector<16x1xf32>
    %22 = arith.addf %18, %21 : vector<16x1xf32>
    %23 = math.rsqrt %22 : vector<16x1xf32>
    %24 = vector.broadcast %23 : vector<16x1xf32> to vector<16x128xf32>
    %25 = arith.mulf %20, %24 : vector<16x128xf32>
    %c0_10 = arith.constant 0 : index
    %c0_11 = arith.constant 0 : index
    %26 = vector.load %arg4[%c0_10, %c0_11] : memref<1x128xf32, #tpu.memory_space<vmem>>, vector<1x128xf32>
    %27 = vector.shape_cast %26 : vector<1x128xf32> to vector<128xf32>
    %28 = vector.shape_cast %27 : vector<128xf32> to vector<1x128xf32>
    %29 = vector.broadcast %28 : vector<1x128xf32> to vector<16x128xf32>
    %30 = arith.mulf %25, %29 : vector<16x128xf32>
    %c0_12 = arith.constant 0 : index
    %c0_13 = arith.constant 0 : index
    %31 = vector.load %arg5[%c0_12, %c0_13] : memref<1x128xf32, #tpu.memory_space<vmem>>, vector<1x128xf32>
    %32 = vector.shape_cast %31 : vector<1x128xf32> to vector<128xf32>
    %33 = vector.shape_cast %32 : vector<128xf32> to vector<1x128xf32>
    %34 = vector.broadcast %33 : vector<1x128xf32> to vector<16x128xf32>
    %35 = arith.addf %30, %34 : vector<16x128xf32>
    %c0_14 = arith.constant 0 : index
    %c0_15 = arith.constant 0 : index
    %36 = vector.load %arg6[%c0_14, %c0_15] : memref<16x128xf32, #tpu.memory_space<vmem>>, vector<16x128xf32>
    tpu.vector_store %arg6[%c0_14, %c0_15], %35 {strides = array<i32>} : memref<16x128xf32, #tpu.memory_space<vmem>>, vector<16x128xf32>,
    return
  }
  func.func @transform_0(%arg0: i32) -> (i32, i32) {
    %c0_i32 = arith.constant 0 : i32
    %c0_i32_0 = arith.constant 0 : i32
    return %arg0, %c0_i32 : i32, i32
  }
  func.func @transform_1(%arg0: i32) -> (i32, i32) {
    %c0_i32 = arith.constant 0 : i32
    %c0_i32_0 = arith.constant 0 : i32
    %c0_i32_1 = arith.constant 0 : i32
    return %c0_i32, %c0_i32_0 : i32, i32
  }
  func.func @transform_2(%arg0: i32) -> (i32, i32) {
    %c0_i32 = arith.constant 0 : i32
    %c0_i32_0 = arith.constant 0 : i32
    %c0_i32_1 = arith.constant 0 : i32
    return %c0_i32, %c0_i32_0 : i32, i32
  }
  func.func @transform_3(%arg0: i32) -> (i32, i32) {
    %c0_i32 = arith.constant 0 : i32
    %c0_i32_0 = arith.constant 0 : i32
    %c0_i32_1 = arith.constant 0 : i32
    return %c0_i32, %c0_i32_0 : i32, i32
  }
  func.func @transform_4(%arg0: i32) -> (i32, i32) {
    %c0_i32 = arith.constant 0 : i32
    %c0_i32_0 = arith.constant 0 : i32
    %c0_i32_1 = arith.constant 0 : i32
    return %c0_i32, %c0_i32_0 : i32, i32
  }
  func.func @transform_5(%arg0: i32) -> (i32, i32) {
    %c0_i32 = arith.constant 0 : i32
    %c0_i32_0 = arith.constant 0 : i32
    return %arg0, %c0_i32 : i32, i32
  }
}

</mosaic_0001>

<llo_original>
// kernel: tpu_custom_call.1
$region0: #{tpu_custom_call.1}
  #allocation0 [shape = 'u32[]', space=smem, size = 0x4, offset = 0x4, fixed_abs, tag = 'smem constant byte address 0x4 - core index']
  #allocation1 [shape = 'u32[144,128]{1,0:T(1,128)}', space=vmem, size = 0x12000, scoped, tag = 'internal scratch']
  %s0 = inlined_call_operand.hbm [shape: bf16[32,192], index: 0, kind: input, shape index: {}]
  %s1 = inlined_call_operand.hbm [shape: bf16[192,128], index: 1, kind: input, shape index: {}]
  %s2 = inlined_call_operand.vmem [shape: f32[1,128], index: 2, kind: input, shape index: {}]
  %s3 = inlined_call_operand.vmem [shape: f32[1,128], index: 3, kind: input, shape index: {}]
  %s4 = inlined_call_operand.vmem [shape: f32[1,128], index: 4, kind: input, shape index: {}]
  %s5 = inlined_call_operand.hbm [shape: f32[32,128], index: 5, kind: output, shape index: {}]
  %s6 = sld [smem:[#allocation0]]
  $region61: #{tpu_custom_call.1} parent=0
    _
  %s8 = ssub.s32 1, %s6
  %s9 = scalar_select 0, %s8, %s6
  $region1: #{tpu_custom_call.1} parent=0
    #allocation2 [shape = 'u8[16384]{0}', space=vmem, size = 0x4000, scoped, tag = 'input window, operand 0']
    #allocation3 [shape = 's32[2]{0}', space=sflag, size = 0x8, scoped, tag = 'scoped memory for tpu_custom_call.1']
    #allocation4 [shape = 's32[2]{0}', space=sflag, size = 0x8, scoped, tag = 'scoped memory for tpu_custom_call.1']
    #allocation5 [shape = 'u8[49152]{0}', space=vmem, size = 0xc000, scoped, tag = 'input window, operand 1, single buffered']
    #allocation6 [shape = 's32[1]{0}', space=sflag, size = 0x4, scoped, tag = 'scoped memory for tpu_custom_call.1']
    #allocation7 [shape = 'u8[16384]{0}', space=vmem, size = 0x4000, scoped, tag = 'output window, operand 0']
    %10 = vsyncpa [#allocation3], 0
    %s11 = scalar_lea.sflag [#allocation3], 1
    %12 = vsyncpa %s11, 0
    %13 = vsyncpa [#allocation6], 0
    %14 = vsyncpa [#allocation4], 0
    %s15 = scalar_lea.sflag [#allocation4], 1
    %16 = vsyncpa %s15, 0
    loop: start=0, step=1, limit=4
    $region2: #{tpu_custom_call.1} parent=1 // loop_pre_header
      _
    $region3: #{tpu_custom_call.1} parent=1 // loop_header
      %s18 = sphi 0, %s22
      %p19 = scmp.ge.s32.totalorder %s18, 4
      %s28 = sphi 0, %s30
      %s31 = sphi 0, %s28
      %s32 = sphi 0, %s31
      %s48 = sphi 0, %s32
      %s52 = sphi 0, %s52
      %s54 = sphi 0, %s52
      %s55 = sphi 0, %s54
      %s69 = sphi 0, %s55
      %s73 = sphi 0, %s73
      %s75 = sphi 0, %s73
      %s76 = sphi 0, %s75
      %s90 = sphi 0, %s76
      %s94 = sphi 0, %s94
      %s96 = sphi 0, %s94
      %s97 = sphi 0, %s96
      %s111 = sphi 0, %s97
      %s115 = sphi 0, %s115
      %s117 = sphi 0, %s115
      %s118 = sphi 0, %s117
      %s132 = sphi 0, %s118
      %s138 = sphi 0, %s140
      %s141 = sphi 0, %s138
      %s142 = sphi 0, %s141
      %s158 = sphi 0, %s142
    $region4: #{tpu_custom_call.1} parent=1 // loop_header_branch
      %21 = sbr.rel (%p19) target = $region8
    $region5: #{tpu_custom_call.1} parent=1 // loop_body
      %s23 = ssub.s32 %s18, 1
      %s24 = ssub.s32 %s18, 2
      %s25 = sadd.s32 %s18, 1
      %s26 = ssub.s32 %s18, %s25
      %p27 = scmp.eq.s32.totalorder %s26, 0
      %s29 = sadd.s32 %s28, 1
      %s30 = scalar_select %p27, %s28, %s29
      %p33 = pneg %p27
      %p34 = scmp.eq.s32.totalorder %s18, 1
      %p35 = por %p33, %p34
      %p36 = scmp.ne.s32.totalorder %s28, %s31
      %p37 = scmp.eq.s32.totalorder %s18, 0
      %p38 = por %p36, %p37
      %p39 = scmp.ne.s32.totalorder %s28, %s31
      %p40 = scmp.eq.s32.totalorder %s23, 1
      %p41 = por %p39, %p40
      %p42 = scmp.ne.s32.totalorder %s31, %s32
      %p43 = scmp.eq.s32.totalorder %s23, 0
      %p44 = por %p42, %p43
      %p45 = scmp.ne.s32.totalorder %s31, %s32
      %p46 = scmp.eq.s32.totalorder %s24, 1
      %p47 = por %p45, %p46
      %p49 = scmp.ne.s32.totalorder %s32, %s48
      %p50 = scmp.eq.s32.totalorder %s24, 0
      %p51 = por %p49, %p50
      %s53 = sadd.s32 %s52, 1
      %p56 = scmp.eq.s32.totalorder %s18, 1
      %p57 = scmp.ne.s32.totalorder %s52, %s54
      %p58 = scmp.eq.s32.totalorder %s18, 0
      %p59 = por %p57, %p58
      %p60 = scmp.ne.s32.totalorder %s52, %s54
      %p61 = scmp.eq.s32.totalorder %s23, 1
      %p62 = por %p60, %p61
      %p63 = scmp.ne.s32.totalorder %s54, %s55
      %p64 = scmp.eq.s32.totalorder %s23, 0
      %p65 = por %p63, %p64
      %p66 = scmp.ne.s32.totalorder %s54, %s55
      %p67 = scmp.eq.s32.totalorder %s24, 1
      %p68 = por %p66, %p67
      %p70 = scmp.ne.s32.totalorder %s55, %s69
      %p71 = scmp.eq.s32.totalorder %s24, 0
      %p72 = por %p70, %p71
      %s74 = sadd.s32 %s73, 1
      %p77 = scmp.eq.s32.totalorder %s18, 1
      %p78 = scmp.ne.s32.totalorder %s73, %s75
      %p79 = scmp.eq.s32.totalorder %s18, 0
      %p80 = por %p78, %p79
      %p81 = scmp.ne.s32.totalorder %s73, %s75
      %p82 = scmp.eq.s32.totalorder %s23, 1
      %p83 = por %p81, %p82
      %p84 = scmp.ne.s32.totalorder %s75, %s76
      %p85 = scmp.eq.s32.totalorder %s23, 0
      %p86 = por %p84, %p85
      %p87 = scmp.ne.s32.totalorder %s75, %s76
      %p88 = scmp.eq.s32.totalorder %s24, 1
      %p89 = por %p87, %p88
      %p91 = scmp.ne.s32.totalorder %s76, %s90
      %p92 = scmp.eq.s32.totalorder %s24, 0
      %p93 = por %p91, %p92
      %s95 = sadd.s32 %s94, 1
      %p98 = scmp.eq.s32.totalorder %s18, 1
      %p99 = scmp.ne.s32.totalorder %s94, %s96
      %p100 = scmp.eq.s32.totalorder %s18, 0
      %p101 = por %p99, %p100
      %p102 = scmp.ne.s32.totalorder %s94, %s96
      %p103 = scmp.eq.s32.totalorder %s23, 1
      %p104 = por %p102, %p103
      %p105 = scmp.ne.s32.totalorder %s96, %s97
      %p106 = scmp.eq.s32.totalorder %s23, 0
      %p107 = por %p105, %p106
      %p108 = scmp.ne.s32.totalorder %s96, %s97
      %p109 = scmp.eq.s32.totalorder %s24, 1
      %p110 = por %p108, %p109
      %p112 = scmp.ne.s32.totalorder %s97, %s111
      %p113 = scmp.eq.s32.totalorder %s24, 0
      %p114 = por %p112, %p113
      %s116 = sadd.s32 %s115, 1
      %p119 = scmp.eq.s32.totalorder %s18, 1
      %p120 = scmp.ne.s32.totalorder %s115, %s117
      %p121 = scmp.eq.s32.totalorder %s18, 0
      %p122 = por %p120, %p121
      %p123 = scmp.ne.s32.totalorder %s115, %s117
      %p124 = scmp.eq.s32.totalorder %s23, 1
      %p125 = por %p123, %p124
      %p126 = scmp.ne.s32.totalorder %s117, %s118
      %p127 = scmp.eq.s32.totalorder %s23, 0
      %p128 = por %p126, %p127
      %p129 = scmp.ne.s32.totalorder %s117, %s118
      %p130 = scmp.eq.s32.totalorder %s24, 1
      %p131 = por %p129, %p130
      %p133 = scmp.ne.s32.totalorder %s118, %s132
      %p134 = scmp.eq.s32.totalorder %s24, 0
      %p135 = por %p133, %p134
      %s136 = ssub.s32 %s18, %s25
      %p137 = scmp.eq.s32.totalorder %s136, 0
      %s139 = sadd.s32 %s138, 1
      %s140 = scalar_select %p137, %s138, %s139
      %p143 = pneg %p137
      %p144 = scmp.eq.s32.totalorder %s18, 1
      %p145 = por %p143, %p144
      %p146 = scmp.ne.s32.totalorder %s138, %s141
      %p147 = scmp.eq.s32.totalorder %s18, 0
      %p148 = por %p146, %p147
      %p149 = scmp.ne.s32.totalorder %s138, %s141
      %p150 = scmp.eq.s32.totalorder %s23, 1
      %p151 = por %p149, %p150
      %p152 = scmp.ne.s32.totalorder %s141, %s142
      %p153 = scmp.eq.s32.totalorder %s23, 0
      %p154 = por %p152, %p153
      %p155 = scmp.ne.s32.totalorder %s141, %s142
      %p156 = scmp.eq.s32.totalorder %s24, 1
      %p157 = por %p155, %p156
      %p159 = scmp.ne.s32.totalorder %s142, %s158
      %p160 = scmp.eq.s32.totalorder %s24, 0
      %p161 = por %p159, %p160
      %p162 = scmp.le.s32.totalorder 1, %s18
      %p163 = scmp.lt.s32.totalorder %s18, 3
      %p164 = pnand %p162, %p163
      %p165 = pneg %p164
      // Predicated region
      $region9: #{tpu_custom_call.1} parent=5 // pred_check
        _
      $region10: #{tpu_custom_call.1} parent=5 // pred_check_branch
        %167 = sbr.rel (%p164) target = $region12
      $region11: #{tpu_custom_call.1} parent=5 // pred_region
        %s168 = ssub.s32 %s18, 1
        // Predicated region
        $region13: #{tpu_custom_call.1} parent=11 // pred_check
          %p169 = pneg %p65
        $region14: #{tpu_custom_call.1} parent=11 // pred_check_branch
          %171 = sbr.rel (%p169) target = $region16
        $region15: #{tpu_custom_call.1} parent=11 // pred_region
          %s173 = ssub.s32 1536, 1536
          %174 = vsyncadd [#allocation6], %s173
          %s175 = sshll.u32 [#allocation5], 4
          %s176 = int_to_ptr.vmem [resolvable:$true] %s175
          %181 = dma.hbm_to_vmem [thread:$0]  %s1, 1536, %s176, [#allocation6], 64, 64, 4
        $region16: #{tpu_custom_call.1} parent=11 // pred_fallthru
          _
        // Predicated region
        $region17: #{tpu_custom_call.1} parent=11 // pred_check
          %p182 = pneg %p86
        $region18: #{tpu_custom_call.1} parent=11 // pred_check_branch
          %184 = sbr.rel (%p182) target = $region20
        $region19: #{tpu_custom_call.1} parent=11 // pred_region
          _
        $region20: #{tpu_custom_call.1} parent=11 // pred_fallthru
          _
        // Predicated region
        $region21: #{tpu_custom_call.1} parent=11 // pred_check
          %p185 = pneg %p107
        $region22: #{tpu_custom_call.1} parent=11 // pred_check_branch
          %187 = sbr.rel (%p185) target = $region24
        $region23: #{tpu_custom_call.1} parent=11 // pred_region
          _
        $region24: #{tpu_custom_call.1} parent=11 // pred_fallthru
          _
        // Predicated region
        $region25: #{tpu_custom_call.1} parent=11 // pred_check
          %p188 = pneg %p128
        $region26: #{tpu_custom_call.1} parent=11 // pred_check_branch
          %190 = sbr.rel (%p188) target = $region28
        $region27: #{tpu_custom_call.1} parent=11 // pred_region
          _
        $region28: #{tpu_custom_call.1} parent=11 // pred_fallthru
          _
      $region12: #{tpu_custom_call.1} parent=5 // pred_fallthru
        _
      %p191 = scmp.lt.s32.totalorder %s18, 2
      // Predicated region
      $region29: #{tpu_custom_call.1} parent=5 // pred_check
        %p192 = pneg %p191
      $region30: #{tpu_custom_call.1} parent=5 // pred_check_branch
        %194 = sbr.rel (%p192) target = $region32
      $region31: #{tpu_custom_call.1} parent=5 // pred_region
        // Predicated region
        $region33: #{tpu_custom_call.1} parent=31 // pred_check
          %p195 = pneg %p38
        $region34: #{tpu_custom_call.1} parent=31 // pred_check_branch
          %197 = sbr.rel (%p195) target = $region36
        $region35: #{tpu_custom_call.1} parent=31 // pred_region
          %s198 = sand.u32 %s28, 1
          %s199 = scalar_lea.sflag [#allocation3], %s198
          %s200 = sand.u32 %s28, 1
          %s201 = smul.addr %s200, 16
          %s202 = scalar_lea.vmem [#allocation2], %s201
          %s203 = smul.u32 2, %s18
          %s205 = ssub.s32 256, 256
          %206 = vsyncadd %s199, %s205
          %s207 = smul.addr %s203, 2
          %s208 = smul.addr %s207, 64
          %s209 = scalar_lea.hbm %s0, %s208
          %s210 = sshll.u32 %s202, 4
          %s211 = int_to_ptr.vmem [resolvable:$true] %s210
          %216 = dma.hbm_to_vmem [thread:$0]  %s209, 256, %s211, %s199, 128, 128, 8
        $region36: #{tpu_custom_call.1} parent=31 // pred_fallthru
          _
      $region32: #{tpu_custom_call.1} parent=5 // pred_fallthru
        _
      %p217 = scmp.le.s32.totalorder 1, %s18
      %p218 = scmp.lt.s32.totalorder %s18, 3
      %p219 = pnand %p217, %p218
      %p220 = pneg %p219
      // Predicated region
      $region37: #{tpu_custom_call.1} parent=5 // pred_check
        _
      $region38: #{tpu_custom_call.1} parent=5 // pred_check_branch
        %222 = sbr.rel (%p219) target = $region40
      $region39: #{tpu_custom_call.1} parent=5 // pred_region
        %s223 = ssub.s32 %s18, 1
        %s224 = sand.u32 %s31, 1
        %s225 = scalar_lea.sflag [#allocation3], %s224
        %s226 = sand.u32 %s31, 1
        %s227 = smul.addr %s226, 16
        %s228 = scalar_lea.vmem [#allocation2], %s227
        // Predicated region
        $region41: #{tpu_custom_call.1} parent=39 // pred_check
          %p229 = pneg %p44
        $region42: #{tpu_custom_call.1} parent=39 // pred_check_branch
          %231 = sbr.rel (%p229) target = $region44
        $region43: #{tpu_custom_call.1} parent=39 // pred_region
          %232 = dma.done %s225, 256
        $region44: #{tpu_custom_call.1} parent=39 // pred_fallthru
          _
        // Predicated region
        $region45: #{tpu_custom_call.1} parent=39 // pred_check
          %p233 = pneg %p65
        $region46: #{tpu_custom_call.1} parent=39 // pred_check_branch
          %235 = sbr.rel (%p233) target = $region48
        $region47: #{tpu_custom_call.1} parent=39 // pred_region
          %236 = dma.done [#allocation6], 1536
        $region48: #{tpu_custom_call.1} parent=39 // pred_fallthru
          _
        %s237 = sand.u32 %s31, 1
        %s238 = scalar_lea.sflag [#allocation3], %s237
        %s239 = sand.u32 %s31, 1
        %s240 = smul.addr %s239, 16
        %s241 = scalar_lea.vmem [#allocation2], %s240
        %p242 = pneg %p44
        %p243 = pneg %p41
        %p244 = pneg %p65
        %p245 = pneg %p62
        %p246 = pneg %p86
        %p247 = pneg %p83
        %p248 = pneg %p107
        %p249 = pneg %p104
        %p250 = pneg %p128
        %p251 = pneg %p125
        %p252 = pneg %p154
        %p253 = pneg %p151
        %s254 = sand.u32 %s141, 1
        %s255 = scalar_lea.sflag [#allocation4], %s254
        %s256 = sand.u32 %s141, 1
        %s257 = smul.addr %s256, 16
        %s258 = scalar_lea.vmem [#allocation7], %s257
        %s259 = smul.u32 2, %s23
        %s260 = smul.u32 2, %s23
        %v262 = vld [vmem:[%s228] sm:$0xff]
        %v263 = vld [vmem:[%s228 + $0x8] sm:$0xff]
        %v264 = vld [vmem:[#allocation5] sm:$0xf]
        %v265 = vld [vmem:[#allocation5 + $0x4] sm:$0xf]
        %v266 = vld [vmem:[#allocation5 + $0x8] sm:$0xf]
        %v267 = vld [vmem:[#allocation5 + $0xc] sm:$0xf]
        %v268 = vld [vmem:[#allocation5 + $0x10] sm:$0xf]
        %v269 = vld [vmem:[#allocation5 + $0x14] sm:$0xf]
        %v270 = vld [vmem:[#allocation5 + $0x18] sm:$0xf]
        %v271 = vld [vmem:[#allocation5 + $0x1c] sm:$0xf]
        %v272 = vld [vmem:[#allocation5 + $0x20] sm:$0xf]
        %v273 = vld [vmem:[#allocation5 + $0x24] sm:$0xf]
        %v274 = vld [vmem:[#allocation5 + $0x28] sm:$0xf]
        %v275 = vld [vmem:[#allocation5 + $0x2c] sm:$0xf]
        %v276 = vld [vmem:[#allocation5 + $0x30] sm:$0xf]
        %v277 = vld [vmem:[#allocation5 + $0x34] sm:$0xf]
        %v278 = vld [vmem:[#allocation5 + $0x38] sm:$0xf]
        %v279 = vld [vmem:[#allocation5 + $0x3c] sm:$0xf]
        %v280 = vld [vmem:[#allocation5 + $0x40] sm:$0xf]
        %v281 = vld [vmem:[#allocation5 + $0x44] sm:$0xf]
        %v282 = vld [vmem:[#allocation5 + $0x48] sm:$0xf]
        %v283 = vld [vmem:[#allocation5 + $0x4c] sm:$0xf]
        %v284 = vld [vmem:[#allocation5 + $0x50] sm:$0xf]
        %v285 = vld [vmem:[#allocation5 + $0x54] sm:$0xf]
        %v286 = vld [vmem:[#allocation5 + $0x58] sm:$0xf]
        %v287 = vld [vmem:[#allocation5 + $0x5c] sm:$0xf]
        %v288 = vld [vmem:[%s2] sm:$0x1]
        %v290 = vlaneseq
        %v291 = vshrl.u32 %v290, 7
        %v292 = vsub.s32 0, %v291
        %v293 = vrot.slane %v288, %v292
        %v297 = vunpack.c.l.b16 %v262
        %v298 = vunpack.c.h.b16 %v262
        %v299 = vunpack.c.l.b16 %v263
        %v300 = vunpack.c.h.b16 %v263
        %v301 = vpack.c.b16 %v299, %v297
        %v302 = vpack.c.b16 %v300, %v298
        %v328 = vunpack.c.l.b16 %v264
        %v329 = vunpack.c.l.b16 %v265
        %v330 = vunpack.c.l.b16 %v266
        %v331 = vunpack.c.l.b16 %v267
        %v332 = vunpack.c.l.b16 %v268
        %v333 = vunpack.c.l.b16 %v269
        %v334 = vunpack.c.l.b16 %v270
        %v335 = vunpack.c.l.b16 %v271
        %v336 = vunpack.c.l.b16 %v272
        %v337 = vunpack.c.l.b16 %v273
        %v338 = vunpack.c.l.b16 %v274
        %v339 = vunpack.c.l.b16 %v275
        %v340 = vunpack.c.l.b16 %v276
        %v341 = vunpack.c.l.b16 %v277
        %v342 = vunpack.c.l.b16 %v278
        %v343 = vunpack.c.l.b16 %v279
        %v344 = vunpack.c.l.b16 %v280
        %v345 = vunpack.c.l.b16 %v281
        %v346 = vunpack.c.l.b16 %v282
        %v347 = vunpack.c.l.b16 %v283
        %v348 = vunpack.c.l.b16 %v284
        %v349 = vunpack.c.l.b16 %v285
        %v350 = vunpack.c.l.b16 %v286
        %v351 = vunpack.c.l.b16 %v287
        %v352 = vpack.c.b16 %v329, %v328
        %v353 = vpack.c.b16 %v331, %v330
        %v354 = vpack.c.b16 %v333, %v332
        %v355 = vpack.c.b16 %v335, %v334
        %v356 = vpack.c.b16 %v337, %v336
        %v357 = vpack.c.b16 %v339, %v338
        %v358 = vpack.c.b16 %v341, %v340
        %v359 = vpack.c.b16 %v343, %v342
        %v360 = vpack.c.b16 %v345, %v344
        %v361 = vpack.c.b16 %v347, %v346
        %v362 = vpack.c.b16 %v349, %v348
        %v363 = vpack.c.b16 %v351, %v350
        %vm376 = vcmask 523264
        %v378 = vsel %vm376, %v302, 0
        %380 = vmatprep.subr.bf16.mxu0 0
        %381 = vmatpush1.bf16.msra.mxu0 %v352
        %382 = vmatprep.subr.bf16.mxu0 0
        %383 = vmatpush1.bf16.msra.mxu0 %v353
        %384 = vmatprep.subr.bf16.mxu0 0
        %385 = vmatpush1.bf16.msra.mxu0 %v354
        %386 = vmatprep.subr.bf16.mxu0 0
        %387 = vmatpush1.bf16.msra.mxu0 %v355
        %388 = vmatprep.subr.bf16.mxu0 0
        %389 = vmatpush1.bf16.msra.mxu0 %v356
        %390 = vmatprep.subr.bf16.mxu0 0
        %391 = vmatpush1.bf16.msra.mxu0 %v357
        %392 = vmatprep.subr.bf16.mxu0 0
        %393 = vmatpush1.bf16.msra.mxu0 %v358
        %394 = vmatprep.subr.bf16.mxu0 0
        %395 = vmatpush1.bf16.msra.mxu0 %v359
        %396 = vmatprep.subr.bf16.mxu0 0
        %397 = vmatpush1.bf16.msra.mxu0 %v360
        %398 = vmatprep.subr.bf16.mxu0 0
        %399 = vmatpush1.bf16.msra.mxu0 %v361
        %400 = vmatprep.subr.bf16.mxu0 0
        %401 = vmatpush1.bf16.msra.mxu0 %v362
        %402 = vmatprep.subr.bf16.mxu0 0
        %403 = vmatpush1.bf16.msra.mxu0 %v363
        %404 = vmatprep.subr.bf16.mxu0 0
        %405 = vmatpush1.bf16.msra.mxu0 0
        %406 = vmatprep.subr.bf16.mxu0 0
        %407 = vmatpush1.bf16.msra.mxu0 0
        %408 = vmatprep.subr.bf16.mxu0 0
        %409 = vmatpush1.bf16.msra.mxu0 0
        %410 = vmatprep.subr.bf16.mxu0 0
        %411 = vmatpush1.bf16.msra.mxu0 0
        %412 = vmatprep.mubr.bf16.mxu0 %v378
        %413 = vmatmul.mubr.bf16.gmra.mrb[0].mxu0 %v301
        %v414 = vpop.f32.mrb[0].mxu0
        %v415 = vadd.f32 %v293, %v414
        %v416 = vpop.f32.mrb[0].mxu0
        %v417 = vpop.f32.mrb[0].mxu0
        %v418 = vadd.f32 %v293, %v417
        %v419 = vpop.f32.mrb[0].mxu0
        %420 = vdwg.mxu0
        %421 = vadd.xlane.f32.xlu0 %v415
        %v422 = vpop.xlane.xlu0 %421
        %423 = vadd.xlane.f32.xlu0 %v418
        %v424 = vpop.xlane.xlu0 %423
        %v425 = vrcp.pop 128.0
        %v426 = vmul.f32 %v422, %v425
        %v427 = vmul.f32 %v424, %v425
        %v428 = vsub.f32 %v415, %v426
        %v429 = vsub.f32 %v418, %v427
        %v430 = vmul.f32 %v428, %v428
        %v431 = vmul.f32 %v429, %v429
        %432 = vadd.xlane.f32.xlu0 %v430
        %v433 = vpop.xlane.xlu0 %432
        %434 = vadd.xlane.f32.xlu0 %v431
        %v435 = vpop.xlane.xlu0 %434
        %v436 = vmul.f32 %v433, %v425
        %v437 = vmul.f32 %v435, %v425
        %v438 = vadd.f32 %v436, 1e-05
        %v439 = vadd.f32 %v437, 1e-05
        %v440 = vrsqrt.pop %v438
        %v441 = vrsqrt.pop %v439
        %v442 = vmul.f32 %v428, %v440
        %v443 = vmul.f32 %v429, %v441
        %v444 = vld [vmem:[%s3] sm:$0x1]
        %v446 = vlaneseq
        %v447 = vshrl.u32 %v446, 7
        %v448 = vsub.s32 0, %v447
        %v449 = vrot.slane %v444, %v448
        %v451 = vmul.f32 %v442, %v449
        %v452 = vmul.f32 %v443, %v449
        %v453 = vld [vmem:[%s4] sm:$0x1]
        %v455 = vlaneseq
        %v456 = vshrl.u32 %v455, 7
        %v457 = vsub.s32 0, %v456
        %v458 = vrot.slane %v453, %v457
        %v460 = vadd.f32 %v451, %v458
        %v461 = vadd.f32 %v452, %v458
        %462 = vst [vmem:[%s258] sm:$0xff] %v460
        %463 = vst [vmem:[%s258 + $0x8] sm:$0xff] %v461
        %s464 = sand.u32 %s141, 1
        %s465 = scalar_lea.sflag [#allocation4], %s464
        %s466 = sand.u32 %s141, 1
        %s467 = smul.addr %s466, 16
        %s468 = scalar_lea.vmem [#allocation7], %s467
        // Predicated region
        $region49: #{tpu_custom_call.1} parent=39 // pred_check
          %p469 = pneg %p151
        $region50: #{tpu_custom_call.1} parent=39 // pred_check_branch
          %471 = sbr.rel (%p469) target = $region52
        $region51: #{tpu_custom_call.1} parent=39 // pred_region
          %s472 = smul.u32 2, %s23
          %s474 = ssub.s32 256, 256
          %475 = vsyncadd %s465, %s474
          %s476 = smul.addr %s472, 128
          %s477 = scalar_lea.hbm %s5, %s476
          %s478 = sshll.u32 %s468, 4
          %s479 = int_to_ptr.vmem [resolvable:$true] %s478
          %484 = dma.vmem_to_hbm [thread:$0]  %s479, 256, %s477, %s465, 128, 128, 8
        $region52: #{tpu_custom_call.1} parent=39 // pred_fallthru
          _
      $region40: #{tpu_custom_call.1} parent=5 // pred_fallthru
        _
      %p485 = scmp.le.s32.totalorder 2, %s18
      // Predicated region
      $region53: #{tpu_custom_call.1} parent=5 // pred_check
        %p486 = pneg %p485
      $region54: #{tpu_custom_call.1} parent=5 // pred_check_branch
        %488 = sbr.rel (%p486) target = $region56
      $region55: #{tpu_custom_call.1} parent=5 // pred_region
        %s489 = ssub.s32 %s18, 2
        // Predicated region
        $region57: #{tpu_custom_call.1} parent=55 // pred_check
          %p490 = pneg %p157
        $region58: #{tpu_custom_call.1} parent=55 // pred_check_branch
          %492 = sbr.rel (%p490) target = $region60
        $region59: #{tpu_custom_call.1} parent=55 // pred_region
          %s493 = sand.u32 %s142, 1
          %s494 = scalar_lea.sflag [#allocation4], %s493
          %s495 = sand.u32 %s142, 1
          %s496 = smul.addr %s495, 16
          %s497 = scalar_lea.vmem [#allocation7], %s496
          %498 = dma.done %s494, 256
        $region60: #{tpu_custom_call.1} parent=55 // pred_fallthru
          _
      $region56: #{tpu_custom_call.1} parent=5 // pred_fallthru
        _
    $region6: #{tpu_custom_call.1} parent=1 // loop_footer
      %s22 = sadd.s32 1, %s18
    $region7: #{tpu_custom_call.1} parent=1 // loop_footer_branch
      %17 = sbr.rel target = $region3
    $region8: #{tpu_custom_call.1} parent=1 // loop_exit
      _
    %499 = vsyncpa [#allocation3], 1
    %s500 = scalar_lea.sflag [#allocation3], 1
    %501 = vsyncpa %s500, 1
    %502 = vsyncpa [#allocation6], 1
    %503 = vsyncpa [#allocation4], 1
    %s504 = scalar_lea.sflag [#allocation4], 1
    %505 = vsyncpa %s504, 1

</llo_original>
